<compile_context>
chip_gen: v7x
topology: tpu7x:2x2x1
jax: 0.10.0
libtpu: 0.0.40
codegen_flags: <defaults>
</compile_context>

<pallas_src>
import jax
import jax.numpy as jnp
from jax.experimental import pallas as pl
from jax.experimental.pallas import tpu as pltpu


def _label_resize_kernel(lab_ref, out_ref):
    # lab_ref: SMEM (B,) int32 labels, untiled, resident across all grid steps.
    # out_ref: VMEM (Bb, H, W) int32 output block for this grid step.
    nb = out_ref.shape[0]                      # static batch block size
    base = pl.program_id(0) * nb               # first image index of this block
    last = lab_ref.shape[0] - 1
    for b in range(nb):                        # static unroll (Bb is small)
        idx = jnp.minimum(base + b, last)      # clamp for a partial last block
        out_ref[b] = jnp.full(out_ref.shape[1:], lab_ref[idx], dtype=out_ref.dtype)


def _physical_vmem_bytes():
    vmem = 64 * 1024 * 1024                    # conservative default (v7x per-TC)
    try:
        info = pltpu.get_tpu_info()
        vmem = int(getattr(info, "vmem_capacity_bytes", vmem))
    except Exception:
        pass
    return vmem


def _num_tensorcores():
    # Used only to decide whether forcing a >=2-step grid is worthwhile
    # (megacore chips: v4 / v7x). Defensive: fall back to 1 TC.
    try:
        info = pltpu.get_tpu_info()
        for name in ("num_cores", "core_count", "num_tensorcores",
                     "tensorcore_count", "num_cores_per_chip", "cores_per_chip"):
            n = getattr(info, name, None)
            if n:
                return int(n)
    except Exception:
        pass
    try:
        kind = jax.devices()[0].device_kind.lower()
        if "v4" in kind or "v7" in kind:
            return 2
    except Exception:
        pass
    return 1


def image_label_resize(x_pix, need_backprop):
    """Pallas equivalent of ImageLabelResizeLayer.forward.

    Args:
      x_pix:          (B, C, H, W) feature map (only H, W used).
      need_backprop:  (B,) per-image scalar label.

    Returns:
      (B, H, W) int32 array: label broadcast over each image's spatial plane.
    """
    B, _, H, W = x_pix.shape

    # Cast once on the (B,) scalar vector; truncation matches torch .long()
    # for finite values.
    # TODO(synk): output is int32 (JAX x64 off by default), not torch's int64.
    labels = need_backprop.astype(jnp.int32).reshape(B)

    # --- batch block size Bb -------------------------------------------------
    # VMEM tile of one image's (H, W) plane is padded to (8, 128) multiples.
    Hp = pl.cdiv(H, 8) * 8
    Wp = pl.cdiv(W, 128) * 128
    bytes_per_image = Hp * Wp * 4

    phys_vmem = _physical_vmem_bytes()
    # Keep the double-buffered output block within ~half of physical VMEM.
    budget = phys_vmem // 2
    Bb = max(1, min(B, budget // (2 * bytes_per_image)))

    # Only force multiple grid steps on chips with >1 TensorCore; on single-TC
    # v5e/v6e the grid is a serial loop, so one big block is best.
    n_tc = _num_tensorcores()
    if n_tc >= 2 and B >= 2:
        Bb = min(Bb, pl.cdiv(B, n_tc))
    grid = (pl.cdiv(B, Bb),)

    # Explicit scoped-VMEM limit: double-buffered output block + headroom,
    # never above physical VMEM (v7x: 64 MiB).
    vmem_limit = int(min(phys_vmem,
                         max(32 * 1024 * 1024,
                             2 * Bb * bytes_per_image + 4 * 1024 * 1024)))

    return pl.pallas_call(
        _label_resize_kernel,
        out_shape=jax.ShapeDtypeStruct((B, H, W), jnp.int32),
        grid=grid,
        in_specs=[pl.BlockSpec(memory_space=pltpu.MemorySpace.SMEM)],
        out_specs=pl.BlockSpec((Bb, H, W), lambda i: (i, 0, 0)),
        compiler_params=pltpu.CompilerParams(
            dimension_semantics=("parallel",),
            vmem_limit_bytes=vmem_limit),
        cost_estimate=pl.CostEstimate(
            flops=0, transcendentals=0,
            bytes_accessed=B * H * W * 4 + B * 4),
    )(labels)


if __name__ == "__main__":
    key = jax.random.PRNGKey(0)
    k1, k2 = jax.random.split(key)

    B, C, H, W = 2, 4, 16, 16
    x_pix = jax.random.normal(k1, (B, C, H, W), dtype=jnp.float32)
    # domain labels (e.g. 0.0 / 1.0 per image), like `need_backprop`
    need_backprop = jax.random.randint(k2, (B,), 0, 2).astype(jnp.float32)

    y_pix = image_label_resize(x_pix, need_backprop)
    y_pix = jax.block_until_ready(y_pix)

    # reference check: each (H, W) plane equals the image's label as int
    ref = jnp.broadcast_to(
        need_backprop.astype(jnp.int32)[:, None, None], (B, H, W))
    assert y_pix.shape == (B, H, W)
    assert y_pix.dtype == jnp.int32
    assert bool(jnp.all(y_pix == ref))

    print("KERNEL_OK")
</pallas_src>

<mosaic_0001>
module attributes {stable_mosaic.version = 11 : i64} {
  func.func @_label_resize_kernel(%arg0: i32, %arg1: memref<2xi32, #tpu.memory_space<smem>>, %arg2: memref<2x16x16xi32, #tpu.memory_space<vmem>>) attributes {dimension_semantics = [#tpu.dimension_semantics<parallel>], iteration_bounds = array<i64: 1>, scalar_prefetch = 0 : i64, scratch_operands = 0 : i64, tpu.core_type = #tpu.core_type<tc>, window_params = [{transform_indices = @transform_0, window_bounds = array<i64: 2>}, {transform_indices = @transform_1, window_bounds = array<i64: 2, 16, 16>}]} {
    %c2_i32 = arith.constant 2 : i32
    %0 = arith.muli %arg0, %c2_i32 : i32
    %c0_i32 = arith.constant 0 : i32
    %1 = arith.addi %0, %c0_i32 : i32
    %c1_i32 = arith.constant 1 : i32
    %2 = arith.minsi %1, %c1_i32 : i32
    %3 = arith.index_cast %2 : i32 to index
    %4 = memref.load %arg1[%3] : memref<2xi32, #tpu.memory_space<smem>>
    %5 = vector.broadcast %4 : i32 to vector<16x16xi32>
    %c0 = arith.constant 0 : index
    %c0_0 = arith.constant 0 : index
    %c0_1 = arith.constant 0 : index
    %6 = vector.load %arg2[%c0, %c0_0, %c0_1] : memref<2x16x16xi32, #tpu.memory_space<vmem>>, vector<1x16x16xi32>
    %7 = vector.shape_cast %6 : vector<1x16x16xi32> to vector<16x16xi32>
    %8 = vector.shape_cast %5 : vector<16x16xi32> to vector<1x16x16xi32>
    tpu.vector_store %arg2[%c0, %c0_0, %c0_1], %8 {strides = array<i32>} : memref<2x16x16xi32, #tpu.memory_space<vmem>>, vector<1x16x16xi32>,
    %c1_i32_2 = arith.constant 1 : i32
    %9 = arith.addi %0, %c1_i32_2 : i32
    %c1_i32_3 = arith.constant 1 : i32
    %10 = arith.minsi %9, %c1_i32_3 : i32
    %11 = arith.index_cast %10 : i32 to index
    %12 = memref.load %arg1[%11] : memref<2xi32, #tpu.memory_space<smem>>
    %13 = vector.broadcast %12 : i32 to vector<16x16xi32>
    %c1 = arith.constant 1 : index
    %c0_4 = arith.constant 0 : index
    %c0_5 = arith.constant 0 : index
    %14 = vector.load %arg2[%c1, %c0_4, %c0_5] : memref<2x16x16xi32, #tpu.memory_space<vmem>>, vector<1x16x16xi32>
    %15 = vector.shape_cast %14 : vector<1x16x16xi32> to vector<16x16xi32>
    %16 = vector.shape_cast %13 : vector<16x16xi32> to vector<1x16x16xi32>
    tpu.vector_store %arg2[%c1, %c0_4, %c0_5], %16 {strides = array<i32>} : memref<2x16x16xi32, #tpu.memory_space<vmem>>, vector<1x16x16xi32>,
    return
  }
  func.func @transform_0(%arg0: i32) -> i32 {
    %c0_i32 = arith.constant 0 : i32
    %c0_i32_0 = arith.constant 0 : i32
    return %c0_i32 : i32
  }
  func.func @transform_1(%arg0: i32) -> (i32, i32, i32) {
    %c0_i32 = arith.constant 0 : i32
    %c0_i32_0 = arith.constant 0 : i32
    %c0_i32_1 = arith.constant 0 : i32
    return %arg0, %c0_i32, %c0_i32_0 : i32, i32, i32
  }
}

</mosaic_0001>

<llo_original>
// kernel: tpu_custom_call.1
$region0: #{tpu_custom_call.1}
  #allocation0 [shape = 'u32[]', space=smem, size = 0x4, offset = 0x4, fixed_abs, tag = 'smem constant byte address 0x4 - core index']
  #allocation1 [shape = 'u32[144,128]{1,0:T(1,128)}', space=vmem, size = 0x12000, scoped, tag = 'internal scratch']
  %s0 = inlined_call_operand.hbm [shape: s32[2], index: 0, kind: input, shape index: {}]
  %s1 = inlined_call_operand.hbm [shape: s32[2,16,16], index: 1, kind: output, shape index: {}]
  %s2 = sld [smem:[#allocation0]]
  $region18: #{tpu_custom_call.1} parent=0
    _
  %s4 = ssub.s32 1, %s2
  %s5 = scalar_select 0, %s4, %s2
  $region1: #{tpu_custom_call.1} parent=0
    #allocation2 [shape = 'u8[512]{0}', space=smem, size = 0x200, scoped, tag = 'input window, operand 0, single buffered']
    #allocation3 [shape = 's32[1]{0}', space=sflag, size = 0x4, scoped, tag = 'scoped memory for tpu_custom_call.1']
    #allocation4 [shape = 's32[1]{0}', space=sflag, size = 0x4, scoped, tag = 'scoped memory for tpu_custom_call.1']
    #allocation5 [shape = 'u8[16384]{0}', space=vmem, size = 0x4000, scoped, tag = 'output window, operand 0, single buffered']
    %6 = vsyncpa [#allocation4], 0
    %7 = vsyncpa [#allocation3], 0
    // Predicated region
    $region2: #{tpu_custom_call.1} parent=1 // pred_check
      _
    $region3: #{tpu_custom_call.1} parent=1 // pred_check_branch
      %9 = sbr.rel (0) target = $region5
    $region4: #{tpu_custom_call.1} parent=1 // pred_region
      %s11 = ssub.s32 16, 16
      %12 = vsyncadd [#allocation4], %s11
      %15 = dma.hbm_to_smem %s0, 16, [#allocation2], [#allocation4]
    $region5: #{tpu_custom_call.1} parent=1 // pred_fallthru
      _
    // Predicated region
    $region6: #{tpu_custom_call.1} parent=1 // pred_check
      _
    $region7: #{tpu_custom_call.1} parent=1 // pred_check_branch
      %17 = sbr.rel (0) target = $region9
    $region8: #{tpu_custom_call.1} parent=1 // pred_region
      %18 = dma.done [#allocation4], 16
    $region9: #{tpu_custom_call.1} parent=1 // pred_fallthru
      _
    %19 = sfence
    %s20 = smul.u32 0, 2
    %p21 = scmp.lt.s32.totalorder %s20, 1
    %s22 = scalar_select %p21, %s20, 1
    %s23 = sld [smem:[#allocation2 + %s22]]
    %v24 = vstv %s23
    %vm25 = vcmask 130048
    %26 = vst.msk [vmem:[#allocation5] sm:$0xff] %vm25, %v24
    %27 = vst.msk [vmem:[#allocation5 + $0x8] sm:$0xff] %vm25, %v24
    %s28 = sadd.s32 %s20, 1
    %p29 = scmp.lt.s32.totalorder %s28, 1
    %s30 = scalar_select %p29, %s28, 1
    %s31 = sld [smem:[#allocation2 + %s30]]
    %v32 = vstv %s31
    %s33 = scalar_lea.vmem [#allocation5], 16
    %34 = vst.msk [vmem:[%s33] sm:$0xff] %vm25, %v32
    %35 = vst.msk [vmem:[%s33 + $0x8] sm:$0xff] %vm25, %v32
    // Predicated region
    $region10: #{tpu_custom_call.1} parent=1 // pred_check
      _
    $region11: #{tpu_custom_call.1} parent=1 // pred_check_branch
      %37 = sbr.rel (0) target = $region13
    $region12: #{tpu_custom_call.1} parent=1 // pred_region
      %s39 = ssub.s32 512, 512
      %40 = vsyncadd [#allocation3], %s39
      %s41 = sshll.u32 [#allocation5], 4
      %s42 = int_to_ptr.vmem [resolvable:$true] %s41
      %47 = dma.vmem_to_hbm [thread:$0]  %s42, 512, %s1, [#allocation3], 128, 128, 8
    $region13: #{tpu_custom_call.1} parent=1 // pred_fallthru
      _
    // Predicated region
    $region14: #{tpu_custom_call.1} parent=1 // pred_check
      _
    $region15: #{tpu_custom_call.1} parent=1 // pred_check_branch
      %49 = sbr.rel (0) target = $region17
    $region16: #{tpu_custom_call.1} parent=1 // pred_region
      %50 = dma.done [#allocation3], 512
    $region17: #{tpu_custom_call.1} parent=1 // pred_fallthru
      _
    %51 = vsyncpa [#allocation3], 1
    %52 = vsyncpa [#allocation4], 1

</llo_original>
